<compile_context>
chip_gen: v7x
topology: tpu7x:2x2x1
jax: 0.10.0
libtpu: 0.0.40
codegen_flags: <defaults>
</compile_context>

<pallas_src>
import functools

import jax
import jax.numpy as jnp
from jax.experimental import pallas as pl
from jax.experimental.pallas import tpu as pltpu


def _policy_act_kernel(feat_ref, w_ref, b_ref, out_ref):
    # feat_ref: [bm, H]   f32 (cast to bf16 in-kernel; cast hides under the input DMA)
    # w_ref:    [H, A+1]  bf16 (cols 0..A-1 = action head, col A = critic head), VMEM-resident
    # b_ref:    [1, A+1]  f32, VMEM-resident
    # out_ref:  [3, bm]   f32 (row 0 = value, row 1 = log_prob, row 2 = bitcast(action))
    feat = feat_ref[...].astype(jnp.bfloat16)
    out = jnp.dot(feat, w_ref[...], preferred_element_type=jnp.float32) + b_ref[...]

    a_dim = w_ref.shape[1] - 1  # static

    # Lane masking instead of sub-lane slicing: keep the [bm, A+1] tile whole.
    col = jax.lax.broadcasted_iota(jnp.int32, out.shape, dimension=1)
    is_logit = col < a_dim

    masked_logits = jnp.where(is_logit, out, -jnp.inf)
    m = jnp.max(masked_logits, axis=-1, keepdims=True)            # [bm, 1]
    p = jnp.where(is_logit, jnp.exp(out - m), 0.0)                # [bm, A+1]

    # deterministic=True: action = mode() = argmax(logits). Since logits[action] == m,
    # log_softmax(logits)[action] = (m - m) - log(sum(exp(logits - m))) = -log(denom).
    logp_row = (-jnp.log(jnp.sum(p, axis=-1))).reshape(1, -1)                      # [1, bm]
    action_row = jnp.argmax(masked_logits, axis=-1).astype(jnp.int32).reshape(1, -1)
    value_row = jnp.sum(jnp.where(col == a_dim, out, 0.0), axis=-1).reshape(1, -1)  # [1, bm]

    # One lane-dense store: [3, bm] with bm on the 128-lane axis.
    out_ref[...] = jnp.concatenate(
        [value_row, logp_row, pltpu.bitcast(action_row, jnp.float32)], axis=0)


def fuse_policy_head_params(wa, ba, wc, bc, *, weight_dtype=jnp.bfloat16):
    """Fuse action + critic heads ONCE at parameter-prep time (not per act() call).

    wa: [H, A], ba: [1, A], wc: [H, 1], bc: [1, 1]  ->  ([H, A+1] weight, [1, A+1] bias)
    """
    w_fused = jnp.concatenate([wa, wc], axis=1).astype(weight_dtype)
    b_fused = jnp.concatenate([ba, bc], axis=1).astype(jnp.float32)
    return w_fused, b_fused


@functools.partial(jax.jit, static_argnames=("block_b",))
def policy_act(features, w_fused, b_fused, *, block_b=1024):
    """features: [B, H] f32; w_fused: [H, A+1] bf16; b_fused: [1, A+1] f32.

    Returns (value [B,1] f32, action [B,1] int32, action_log_probs [B,1] f32).
    For best v5e MXU utilization keep H (the K dim) a multiple of 128 upstream.
    """
    B, H = features.shape
    A1 = w_fused.shape[1]
    assert block_b % 128 == 0, "block_b must be a multiple of 128 (lane-dense output)"

    # --- batch tile selection -------------------------------------------------
    # bm is a multiple of 128 (lane-dense [3, bm] output blocks) unless the whole
    # batch is tiny, in which case bm == B (full-dim block satisfies layout rules).
    if B >= block_b:
        bm = block_b
    elif B >= 4 * 128:
        # Batch fits in one block: still split into >=4 lane-aligned tiles so the
        # "parallel" grid axis shards across both TensorCores on v7x.
        bm = pl.cdiv(pl.cdiv(B, 4), 128) * 128
    else:
        bm = B
    # Cap bm so the double-buffered f32 feature tiles stay inside a conservative
    # VMEM budget (v7x has only 64 MiB physical / 32 MiB scoped per TensorCore).
    if bm >= 128:
        feat_budget = 24 * 1024 * 1024
        bm_cap = max(128, (feat_budget // (2 * H * 4)) // 128 * 128)
        bm = min(bm, bm_cap)
    grid = (pl.cdiv(B, bm),)

    # Explicit VMEM limit (v5e scoped default is only 16 MiB), sized to actual need.
    vmem_need = 2 * (bm * H * 4 + 8 * bm * 4) + 2 * (H * A1 * 2 + A1 * 4)
    vmem_limit = int(min(48 * 1024 * 1024,
                         max(16 * 1024 * 1024, vmem_need + 8 * 1024 * 1024)))

    cost = pl.CostEstimate(
        flops=2 * B * H * A1,
        transcendentals=B * (A1 + 1),
        bytes_accessed=B * H * 4 + H * A1 * 2 + A1 * 4 + 3 * B * 4,
    )

    # NOTE: the weight/bias BlockSpecs always map to block (0, 0); they could be marked
    # pipeline_mode=pl.Buffered(1) to drop the redundant second buffer (tiny VMEM win).
    packed = pl.pallas_call(
        _policy_act_kernel,
        out_shape=jax.ShapeDtypeStruct((3, B), jnp.float32),
        grid_spec=pltpu.PrefetchScalarGridSpec(
            num_scalar_prefetch=0,
            grid=grid,
            in_specs=[
                pl.BlockSpec((bm, H), lambda i: (i, 0)),     # feature tile (pipelined, f32)
                pl.BlockSpec((H, A1), lambda i: (0, 0)),     # fused weight (VMEM-resident)
                pl.BlockSpec((1, A1), lambda i: (0, 0)),     # fused bias (VMEM-resident)
            ],
            out_specs=pl.BlockSpec((3, bm), lambda i: (0, i)),
        ),
        compiler_params=pltpu.CompilerParams(
            dimension_semantics=("parallel",),               # v7x: shard batch tiles over 2 TCs
            vmem_limit_bytes=vmem_limit,
        ),
        cost_estimate=cost,
    )(features, w_fused, b_fused)

    value = packed[0, :][:, None]                                        # [B, 1] f32
    logp = packed[1, :][:, None]                                         # [B, 1] f32
    action = jax.lax.bitcast_convert_type(packed[2, :], jnp.int32)[:, None]  # [B, 1] int32
    return value, action, logp


def _orthogonal(key, rows, cols, gain=1.0):
    """Deterministic orthogonal init (matches nn.init.orthogonal_ semantics)."""
    n = max(rows, cols)
    a = jax.random.normal(key, (n, n), dtype=jnp.float32)
    q, r = jnp.linalg.qr(a)
    q = q * jnp.sign(jnp.diag(r))[None, :]
    return gain * q[:rows, :cols]


def _reference(features, wa, ba, wc, bc):
    # Same bf16-operand / f32-accumulation numerics as the kernel.
    f = features.astype(jnp.bfloat16)
    logits = jnp.dot(f, wa.astype(jnp.bfloat16), preferred_element_type=jnp.float32) + ba
    value = jnp.dot(f, wc.astype(jnp.bfloat16), preferred_element_type=jnp.float32) + bc
    lp = jax.nn.log_softmax(logits, axis=-1)
    action = jnp.argmax(logits, axis=-1)
    logp = jnp.take_along_axis(lp, action[:, None], axis=-1)
    return value, action[:, None].astype(jnp.int32), logp


if __name__ == "__main__":
    B, H, A = 8, 32, 4          # batch, net.output_size, dim_actions

    key = jax.random.PRNGKey(0)
    k_feat, k_wa, k_wc = jax.random.split(key, 3)

    features = jax.random.normal(k_feat, (B, H), dtype=jnp.float32)

    # CategoricalNet linear: orthogonal(gain=0.01), bias=0 (torch weight is [A, H])
    wa = _orthogonal(k_wa, A, H, gain=0.01).T               # [H, A]
    ba = jnp.zeros((1, A), dtype=jnp.float32)
    # CriticHead linear: orthogonal(gain=1), bias=0
    wc = _orthogonal(k_wc, 1, H, gain=1.0).T                # [H, 1]
    bc = jnp.zeros((1, 1), dtype=jnp.float32)

    # Pre-fuse heads ONCE (parameter prep time), not inside the per-step act() call.
    w_fused, b_fused = fuse_policy_head_params(wa, ba, wc, bc)

    value, action, logp = policy_act(features, w_fused, b_fused)
    jax.block_until_ready((value, action, logp))

    v_ref, a_ref, lp_ref = _reference(features, wa, ba, wc, bc)
    assert jnp.allclose(value, v_ref, atol=2e-4), "value mismatch"
    assert jnp.array_equal(action, a_ref), "action mismatch"
    assert jnp.allclose(logp, lp_ref, atol=5e-4), "log_prob mismatch"

    print("KERNEL_OK")
</pallas_src>

<mosaic_0001>
module attributes {stable_mosaic.version = 11 : i64} {
  func.func @_policy_act_kernel(%arg0: i32, %arg1: memref<8x32xf32, #tpu.memory_space<vmem>>, %arg2: memref<32x5xbf16, #tpu.memory_space<vmem>>, %arg3: memref<1x5xf32, #tpu.memory_space<vmem>>, %arg4: memref<3x8xf32, #tpu.memory_space<vmem>>) attributes {dimension_semantics = [#tpu.dimension_semantics<parallel>], iteration_bounds = array<i64: 1>, scalar_prefetch = 0 : i64, scratch_operands = 0 : i64, tpu.core_type = #tpu.core_type<tc>, window_params = [{transform_indices = @transform_0, window_bounds = array<i64: 8, 32>}, {pipeline_mode = #tpu.pipeline_mode<synchronous>, transform_indices = @transform_1, window_bounds = array<i64: 32, 5>}, {pipeline_mode = #tpu.pipeline_mode<synchronous>, transform_indices = @transform_2, window_bounds = array<i64: 1, 5>}, {transform_indices = @transform_3, window_bounds = array<i64: 3, 8>}]} {
    %c0 = arith.constant 0 : index
    %c0_0 = arith.constant 0 : index
    %0 = vector.load %arg1[%c0, %c0_0] : memref<8x32xf32, #tpu.memory_space<vmem>>, vector<8x32xf32>
    %1 = arith.truncf %0 : vector<8x32xf32> to vector<8x32xbf16>
    %c0_1 = arith.constant 0 : index
    %c0_2 = arith.constant 0 : index
    %2 = vector.load %arg2[%c0_1, %c0_2] : memref<32x5xbf16, #tpu.memory_space<vmem>>, vector<32x5xbf16>
    %cst = arith.constant dense<0.000000e+00> : vector<8x5xf32>
    %3 = tpu.matmul %1, %2, %cst {dimension_numbers = #tpu.dot_dimension_numbers<[1], [0], [0], [1], [0, 0, 1, 1], [], []>} : vector<8x32xbf16>, vector<32x5xbf16>, vector<8x5xf32> -> vector<8x5xf32>
    %c0_3 = arith.constant 0 : index
    %c0_4 = arith.constant 0 : index
    %4 = vector.load %arg3[%c0_3, %c0_4] : memref<1x5xf32, #tpu.memory_space<vmem>>, vector<1x5xf32>
    %5 = vector.broadcast %4 : vector<1x5xf32> to vector<8x5xf32>
    %6 = arith.addf %3, %5 : vector<8x5xf32>
    %7 = tpu.iota {dimensions = array<i32: 1>} : vector<8x5xi32>
    %c4_i32 = arith.constant 4 : i32
    %8 = vector.broadcast %c4_i32 : i32 to vector<8x5xi32>
    %9 = arith.cmpi slt, %7, %8 : vector<8x5xi32>
    %cst_5 = arith.constant 0xFF800000 : f32
    %10 = vector.broadcast %cst_5 : f32 to vector<8x5xf32>
    %11 = arith.select %9, %6, %10 : vector<8x5xi1>, vector<8x5xf32>
    %cst_6 = arith.constant dense<0xFF800000> : vector<8xf32>
    %12 = vector.multi_reduction <maximumf>, %11, %cst_6 [1] : vector<8x5xf32> to vector<8xf32>
    %13 = vector.shape_cast %12 : vector<8xf32> to vector<8x1xf32>
    %14 = vector.broadcast %13 : vector<8x1xf32> to vector<8x5xf32>
    %15 = arith.subf %6, %14 : vector<8x5xf32>
    %16 = math.exp %15 : vector<8x5xf32>
    %cst_7 = arith.constant 0.000000e+00 : f32
    %17 = vector.broadcast %cst_7 : f32 to vector<8x5xf32>
    %18 = arith.select %9, %16, %17 : vector<8x5xi1>, vector<8x5xf32>
    %cst_8 = arith.constant dense<0.000000e+00> : vector<8xf32>
    %19 = vector.multi_reduction <add>, %18, %cst_8 [1] : vector<8x5xf32> to vector<8xf32>
    %20 = math.log %19 : vector<8xf32>
    %cst_9 = arith.constant 0.000000e+00 : f32
    %21 = vector.broadcast %cst_9 : f32 to vector<8xf32>
    %22 = arith.subf %21, %20 : vector<8xf32>
    %23 = vector.shape_cast %22 : vector<8xf32> to vector<1x8xf32>
    %24 = tpu.reduce_index %11 {axis = 1 : i32, kind = #tpu.reduction_kind<arg_max>} : vector<8x5xf32> -> vector<8xi32>
    %25 = vector.shape_cast %24 : vector<8xi32> to vector<1x8xi32>
    %c4_i32_10 = arith.constant 4 : i32
    %26 = vector.broadcast %c4_i32_10 : i32 to vector<8x5xi32>
    %27 = arith.cmpi eq, %7, %26 : vector<8x5xi32>
    %cst_11 = arith.constant 0.000000e+00 : f32
    %28 = vector.broadcast %cst_11 : f32 to vector<8x5xf32>
    %29 = arith.select %27, %6, %28 : vector<8x5xi1>, vector<8x5xf32>
    %cst_12 = arith.constant dense<0.000000e+00> : vector<8xf32>
    %30 = vector.multi_reduction <add>, %29, %cst_12 [1] : vector<8x5xf32> to vector<8xf32>
    %31 = vector.shape_cast %30 : vector<8xf32> to vector<1x8xf32>
    %32 = tpu.bitcast %25 : vector<1x8xi32> -> vector<1x8xf32>
    %33 = tpu.concatenate %31, %23, %32 in 0 : vector<1x8xf32>, vector<1x8xf32>, vector<1x8xf32> -> vector<3x8xf32>
    %c0_13 = arith.constant 0 : index
    %c0_14 = arith.constant 0 : index
    %34 = vector.load %arg4[%c0_13, %c0_14] : memref<3x8xf32, #tpu.memory_space<vmem>>, vector<3x8xf32>
    tpu.vector_store %arg4[%c0_13, %c0_14], %33 {strides = array<i32>} : memref<3x8xf32, #tpu.memory_space<vmem>>, vector<3x8xf32>,
    return
  }
  func.func @transform_0(%arg0: i32) -> (i32, i32) {
    %c0_i32 = arith.constant 0 : i32
    %c0_i32_0 = arith.constant 0 : i32
    return %arg0, %c0_i32 : i32, i32
  }
  func.func @transform_1(%arg0: i32) -> (i32, i32) {
    %c0_i32 = arith.constant 0 : i32
    %c0_i32_0 = arith.constant 0 : i32
    %c0_i32_1 = arith.constant 0 : i32
    return %c0_i32, %c0_i32_0 : i32, i32
  }
  func.func @transform_2(%arg0: i32) -> (i32, i32) {
    %c0_i32 = arith.constant 0 : i32
    %c0_i32_0 = arith.constant 0 : i32
    %c0_i32_1 = arith.constant 0 : i32
    return %c0_i32, %c0_i32_0 : i32, i32
  }
  func.func @transform_3(%arg0: i32) -> (i32, i32) {
    %c0_i32 = arith.constant 0 : i32
    %c0_i32_0 = arith.constant 0 : i32
    return %c0_i32, %arg0 : i32, i32
  }
}

</mosaic_0001>

<llo_original>
// kernel: policy_act.1
$region0: #{policy_act.1}
  #allocation0 [shape = 'u32[]', space=smem, size = 0x4, offset = 0x4, fixed_abs, tag = 'smem constant byte address 0x4 - core index']
  #allocation1 [shape = 'u32[144,128]{1,0:T(1,128)}', space=vmem, size = 0x12000, scoped, tag = 'internal scratch']
  %s0 = inlined_call_operand.vmem [shape: f32[8,32], index: 0, kind: input, shape index: {}]
  %s1 = inlined_call_operand.vmem [shape: bf16[32,5], index: 1, kind: input, shape index: {}]
  %s2 = inlined_call_operand.vmem [shape: f32[1,5], index: 2, kind: input, shape index: {}]
  %s3 = inlined_call_operand.vmem [shape: f32[3,8], index: 3, kind: output, shape index: {}]
  %s4 = sld [smem:[#allocation0]]
  $region22: #{policy_act.1} parent=0
    _
  %s6 = ssub.s32 1, %s4
  %s7 = scalar_select 0, %s6, %s4
  // Predicated region
  $region2: #{policy_act.1} parent=0 // pred_check
    _
  $region3: #{policy_act.1} parent=0 // pred_check_branch
    %9 = sbr.rel (0) target = $region5
  $region4: #{policy_act.1} parent=0 // pred_region
    _
  $region5: #{policy_act.1} parent=0 // pred_fallthru
    _
  // Predicated region
  $region6: #{policy_act.1} parent=0 // pred_check
    _
  $region7: #{policy_act.1} parent=0 // pred_check_branch
    %11 = sbr.rel (0) target = $region9
  $region8: #{policy_act.1} parent=0 // pred_region
    _
  $region9: #{policy_act.1} parent=0 // pred_fallthru
    _
  // Predicated region
  $region10: #{policy_act.1} parent=0 // pred_check
    _
  $region11: #{policy_act.1} parent=0 // pred_check_branch
    %13 = sbr.rel (0) target = $region13
  $region12: #{policy_act.1} parent=0 // pred_region
    _
  $region13: #{policy_act.1} parent=0 // pred_fallthru
    _
  %v15 = vld [vmem:[%s0] sm:$0xff]
  %v16 = vpack.c.bf16 %v15, %v15
  %v17 = vld [vmem:[%s1] sm:$0xf]
  %v18 = vld [vmem:[%s1 + $0x4] sm:$0xf]
  %v19 = vld [vmem:[%s1 + $0x8] sm:$0xf]
  %v20 = vld [vmem:[%s1 + $0xc] sm:$0xf]
  %v21 = vld [vmem:[%s2] sm:$0x1]
  %v23 = vlaneseq
  %v24 = vshrl.u32 %v23, 7
  %v25 = vsub.s32 0, %v24
  %v26 = vrot.slane %v21, %v25
  %v32 = vunpack.c.l.b16 %v17
  %v33 = vunpack.c.l.b16 %v18
  %v34 = vunpack.c.l.b16 %v19
  %v35 = vunpack.c.l.b16 %v20
  %v36 = vpack.c.b16 %v33, %v32
  %v37 = vpack.c.b16 %v35, %v34
  %vm40 = vcmask 261120
  %v42 = vsel %vm40, %v16, 0
  %44 = vmatprep.subr.bf16.mxu0 0
  %45 = vmatpush1.bf16.msra.mxu0 %v36
  %46 = vmatprep.subr.bf16.mxu0 0
  %47 = vmatpush1.bf16.msra.mxu0 %v37
  %48 = vmatprep.subr.bf16.mxu0 0
  %49 = vmatpush1.bf16.msra.mxu0 0
  %50 = vmatprep.subr.bf16.mxu0 0
  %51 = vmatpush1.bf16.msra.mxu0 0
  %52 = vmatprep.subr.bf16.mxu0 0
  %53 = vmatpush1.bf16.msra.mxu0 0
  %54 = vmatprep.subr.bf16.mxu0 0
  %55 = vmatpush1.bf16.msra.mxu0 0
  %56 = vmatprep.subr.bf16.mxu0 0
  %57 = vmatpush1.bf16.msra.mxu0 0
  %58 = vmatprep.subr.bf16.mxu0 0
  %59 = vmatpush1.bf16.msra.mxu0 0
  %60 = vmatprep.subr.bf16.mxu0 0
  %61 = vmatpush1.bf16.msra.mxu0 0
  %62 = vmatprep.subr.bf16.mxu0 0
  %63 = vmatpush1.bf16.msra.mxu0 0
  %64 = vmatprep.subr.bf16.mxu0 0
  %65 = vmatpush1.bf16.msra.mxu0 0
  %66 = vmatprep.subr.bf16.mxu0 0
  %67 = vmatpush1.bf16.msra.mxu0 0
  %68 = vmatprep.subr.bf16.mxu0 0
  %69 = vmatpush1.bf16.msra.mxu0 0
  %70 = vmatprep.subr.bf16.mxu0 0
  %71 = vmatpush1.bf16.msra.mxu0 0
  %72 = vmatprep.subr.bf16.mxu0 0
  %73 = vmatpush1.bf16.msra.mxu0 0
  %74 = vmatprep.subr.bf16.mxu0 0
  %75 = vmatpush1.bf16.msra.mxu0 0
  %76 = vmatprep.mubr.bf16.mxu0 0
  %77 = vmatmul.mubr.bf16.gmra.mrb[0].mxu0 %v42
  %v78 = vpop.f32.mrb[0].mxu0
  %v79 = vadd.f32 %v26, %v78
  %v80 = vpop.f32.mrb[0].mxu0
  %v81 = vpop.f32.mrb[0].mxu0
  %v82 = vpop.f32.mrb[0].mxu0
  %83 = vdwg.mxu0
  %v84 = vlaneseq
  %v85 = vand.u32 %v84, 127
  %vm86 = vcmp.lt.s32.totalorder %v85, 4
  %v87 = vsel %vm86, %v79, -inf
  %vm88 = vcmask 39936
  %v89 = vsel %vm88, %v87, -inf
  %90 = vmax.xlane.f32.xlu0 %v89
  %v91 = vpop.xlane.xlu0 %90
  %v92 = vsub.f32 %v79, %v91
  %v93 = vmul.f32 %v92, 1.442695
  %v94 = vpow.pop %v93
  %v95 = vsel %vm86, %v94, 0.0
  %v96 = vsel %vm88, %v95, 0.0
  %97 = vadd.xlane.f32.xlu0 %v96
  %v98 = vpop.xlane.xlu0 %97
  %v99 = vlog2.pop %v98
  %v100 = vmul.f32 %v99, 0.6931472
  %v101 = vsub.f32 0.0, %v100
  %102 = vmax.index.xlane.f32.xlu0 %v89
  %v103 = vpop.xlane.xlu0 %102
  %vm104 = vcmp.eq.s32.totalorder %v85, 4
  %v105 = vsel %vm104, %v79, 0.0
  %v106 = vsel %vm88, %v105, 0.0
  %107 = vadd.xlane.f32.xlu0 %v106
  %v108 = vpop.xlane.xlu0 %107
  %v110 = vlaneseq
  %v111 = vshrl.u32 %v110, 7
  %v112 = vsub.s32 %v85, %v111
  %v113 = vrot.slane %v108, %v112
  %v116 = vlaneseq
  %v117 = vshrl.u32 %v116, 7
  %v118 = vsub.s32 %v85, %v117
  %v119 = vrot.slane %v101, %v118
  %v121 = vlaneseq
  %v122 = vshrl.u32 %v121, 7
  %v123 = vsub.s32 %v85, %v122
  %v124 = vrot.slane %v103, %v123
  %vm126 = vcmask 1040384
  %v127 = vsel %vm126, %v113, %v119
  %vm128 = vcmask 1041408
  %v129 = vsel %vm128, %v127, %v124
  %vm130 = vcmask 59392
  %131 = vst.msk [vmem:[%s3] sm:$0x7] %vm130, %v129
  // Predicated region
  $region14: #{policy_act.1} parent=0 // pred_check
    _
  $region15: #{policy_act.1} parent=0 // pred_check_branch
    %133 = sbr.rel (0) target = $region17
  $region16: #{policy_act.1} parent=0 // pred_region
    _
  $region17: #{policy_act.1} parent=0 // pred_fallthru
    _
  // Predicated region
  $region18: #{policy_act.1} parent=0 // pred_check
    _
  $region19: #{policy_act.1} parent=0 // pred_check_branch
    %135 = sbr.rel (0) target = $region21
  $region20: #{policy_act.1} parent=0 // pred_region
    _
  $region21: #{policy_act.1} parent=0 // pred_fallthru
    _

</llo_original>
